<compile_context>
chip_gen: v5e
topology: v5e:2x2
jax: 0.10.0
libtpu: 0.0.40
codegen_flags: <defaults>
</compile_context>

<pallas_src>
import jax
import jax.numpy as jnp
from jax.experimental import pallas as pl
from jax.experimental.pallas import tpu as pltpu


# ---------------- model dims (small, consistent with the module) ----------------
B = 2                  # batch
C_IN = 3               # xyz per point
N_PTS = 64             # points per cloud              (B * N_PTS == 128 -> full lane width)
LANES = B * N_PTS      # 128
FEAT_PAD = 128         # padded feature/contraction width (one full MXU tile)
B_PAD = 8              # padded batch rows -> full (8, 128) output tile, unmasked store
H1, H2, H3 = 16, 32, 64
OUTPUT_DIM = 32        # args.output_dim  -> emd
CLASS_NUM = 8          # args.class_num   -> out (self_top_layer, bias=False)

assert LANES == 128 and B_PAD >= B and OUTPUT_DIM + CLASS_NUM <= LANES


def _mesh_kernel(x_ref, p_ref, o_ref):
    # x_ref: (128, 128)  rows 0..2 = xyz (points on lanes), row 3 = ones (bias carrier),
    #                    rows 4..127 = zeros.
    # p_ref: (4, 128, 128) packed parameter slab (see prepare_params).
    h = x_ref[...]

    # Per-point shared MLP: three aligned full-tile MXU matmuls; biases are folded into the
    # weight blocks and a constant ones-row is carried through each layer (relu(1) == 1).
    h = jnp.maximum(jnp.dot(p_ref[0], h, preferred_element_type=jnp.float32), 0.0)  # (128,128)
    h = jnp.maximum(jnp.dot(p_ref[1], h, preferred_element_type=jnp.float32), 0.0)
    h = jnp.maximum(jnp.dot(p_ref[2], h, preferred_element_type=jnp.float32), 0.0)

    # Global max-pool over points (batch b owns lanes [b*N_PTS, (b+1)*N_PTS)): one square
    # XLU transpose + per-batch sublane max-reduces, assembled straight into an (8,128) g.
    h_t = h.T                                                         # (128, 128)
    pooled = [jnp.max(h_t[b * N_PTS:(b + 1) * N_PTS, :], axis=0, keepdims=True)
              for b in range(B)]                                      # B x (1, 128)
    g = jnp.concatenate(pooled + [jnp.zeros((B_PAD - B, LANES), jnp.float32)],
                        axis=0)                                       # (8, 128)

    # Fused FC->emd + bias-free top linear (+ both biases via the carried ones column):
    #   o[b, :] = [emd | out | 0]  -> one matmul, one unmasked full-tile (8,128) store.
    o_ref[...] = jnp.dot(g, p_ref[3], preferred_element_type=jnp.float32)


@jax.jit
def unsupervised_meshnet_forward(x_ncl, pslab):
    """x_ncl: [B, 3, N] float32 (PyTorch Conv1d layout). Returns (out, emd)."""
    # [B, 3, N] -> [3, B*N]: every point of every cloud on the 128-wide lane axis, plus a
    # ones row (bias carrier) and zero rows up to a full 128-row MXU tile.  This chain is
    # allowed to fuse into the pallas_call input (no standalone XLA transpose launch).
    x2 = jnp.transpose(x_ncl, (1, 0, 2)).reshape(C_IN, LANES)
    x_in = jnp.concatenate(
        [x2,
         jnp.ones((1, LANES), jnp.float32),
         jnp.zeros((FEAT_PAD - C_IN - 1, LANES), jnp.float32)], axis=0)   # (128, 128)

    slab = pl.pallas_call(
        _mesh_kernel,
        out_shape=jax.ShapeDtypeStruct((B_PAD, LANES), jnp.float32),
        compiler_params=pltpu.CompilerParams(
            allow_input_fusion=[True, False]),     # fuse the x transpose/pad into the call
    )(x_in, pslab)

    emd = slab[:B, :OUTPUT_DIM]                               # (B, output_dim)
    out = slab[:B, OUTPUT_DIM:OUTPUT_DIM + CLASS_NUM]         # (B, class_num)
    return out, emd


def prepare_params(params):
    """One-time host-side prep: pack ALL weights and biases into a single (4,128,128) slab.

    Block k is layer k's transposed weight with its bias folded in via an extra "ones"
    input column, zero-padded (real zeros) to a full (128,128) MXU tile.  Each block also
    forwards the ones row so it stays available for the next layer's bias.
    Block 3 fuses FC->emd and the bias-free top linear:  [w4 | w4@wt | 0] with the bias row
    [b4 | b4@wt | 0] at the ones position.
    """
    w1, b1, w2, b2, w3, b3, w4, b4, wt = params
    z = lambda: jnp.zeros((FEAT_PAD, FEAT_PAD), jnp.float32)

    blk0 = (z().at[:H1, :C_IN].set(w1.T)      # per-point layer 1
               .at[:H1, C_IN].set(b1)
               .at[H1, C_IN].set(1.0))        # propagate the ones row
    blk1 = (z().at[:H2, :H1].set(w2.T)        # layer 2
               .at[:H2, H1].set(b2)
               .at[H2, H1].set(1.0))
    blk2 = (z().at[:H3, :H2].set(w3.T)        # layer 3
               .at[:H3, H2].set(b3)
               .at[H3, H2].set(1.0))
    blk3 = (z().at[:H3, :OUTPUT_DIM].set(w4)                                 # FC -> emd
               .at[:H3, OUTPUT_DIM:OUTPUT_DIM + CLASS_NUM].set(w4 @ wt)     # fused top layer
               .at[H3, :OUTPUT_DIM].set(b4)                                  # b4
               .at[H3, OUTPUT_DIM:OUTPUT_DIM + CLASS_NUM].set(b4 @ wt))      # b4 @ wt
    return jnp.stack([blk0, blk1, blk2, blk3])                # (4, 128, 128) f32, ~256 KiB


def init_params(key):
    ks = jax.random.split(key, 10)

    def lin(k, fan_in, fan_out):
        return (jax.random.normal(k, (fan_in, fan_out), jnp.float32)
                * (2.0 / fan_in) ** 0.5)

    w1 = lin(ks[0], C_IN, H1); b1 = 0.1 * jax.random.normal(ks[1], (H1,), jnp.float32)
    w2 = lin(ks[2], H1, H2);   b2 = 0.1 * jax.random.normal(ks[3], (H2,), jnp.float32)
    w3 = lin(ks[4], H2, H3);   b3 = 0.1 * jax.random.normal(ks[5], (H3,), jnp.float32)
    w4 = lin(ks[6], H3, OUTPUT_DIM)
    b4 = 0.1 * jax.random.normal(ks[7], (OUTPUT_DIM,), jnp.float32)
    # self_top_layer: nn.Linear(output_dim, class_num, bias=False); stored pre-transposed.
    wt = lin(ks[8], OUTPUT_DIM, CLASS_NUM)
    return (w1, b1, w2, b2, w3, b3, w4, b4, wt)


def _reference(x_ncl, params):
    w1, b1, w2, b2, w3, b3, w4, b4, wt = params
    x = jnp.transpose(x_ncl, (0, 2, 1))                      # [B, N, 3]
    h = jnp.maximum(x @ w1 + b1, 0.0)
    h = jnp.maximum(h @ w2 + b2, 0.0)
    h = jnp.maximum(h @ w3 + b3, 0.0)
    g = jnp.max(h, axis=1)                                   # [B, H3]
    emd = g @ w4 + b4
    out = emd @ wt
    return out, emd


if __name__ == "__main__":
    key = jax.random.PRNGKey(0)
    kx, kp = jax.random.split(key)
    x = jax.random.normal(kx, (B, C_IN, N_PTS), jnp.float32)  # PyTorch NCL layout
    params = init_params(kp)
    pslab = prepare_params(params)                            # one packed param slab (host, once)

    out, emd = unsupervised_meshnet_forward(x, pslab)
    jax.block_until_ready((out, emd))

    ref_out, ref_emd = _reference(x, params)
    assert out.shape == (B, CLASS_NUM) and emd.shape == (B, OUTPUT_DIM)
    assert jnp.allclose(emd, ref_emd, atol=1e-4, rtol=1e-4)
    assert jnp.allclose(out, ref_out, atol=1e-4, rtol=1e-4)
    print("KERNEL_OK")
</pallas_src>

<mosaic_0001>
module attributes {stable_mosaic.version = 11 : i64} {
  func.func @_mesh_kernel(%arg0: memref<128x128xf32, #tpu.memory_space<vmem>>, %arg1: memref<4x128x128xf32, #tpu.memory_space<vmem>>, %arg2: memref<8x128xf32, #tpu.memory_space<vmem>>) attributes {dimension_semantics = [], scalar_prefetch = 0 : i64, scratch_operands = 0 : i64, tpu.core_type = #tpu.core_type<tc>} {
    %c0 = arith.constant 0 : index
    %c0_0 = arith.constant 0 : index
    %0 = vector.load %arg0[%c0, %c0_0] : memref<128x128xf32, #tpu.memory_space<vmem>>, vector<128x128xf32>
    %c0_1 = arith.constant 0 : index
    %c0_2 = arith.constant 0 : index
    %c0_3 = arith.constant 0 : index
    %1 = vector.load %arg1[%c0_1, %c0_2, %c0_3] : memref<4x128x128xf32, #tpu.memory_space<vmem>>, vector<1x128x128xf32>
    %2 = vector.shape_cast %1 : vector<1x128x128xf32> to vector<128x128xf32>
    %cst = arith.constant dense<0.000000e+00> : vector<128x128xf32>
    %3 = tpu.matmul %2, %0, %cst {dimension_numbers = #tpu.dot_dimension_numbers<[1], [0], [0], [1], [0, 0, 1, 1], [], []>} : vector<128x128xf32>, vector<128x128xf32>, vector<128x128xf32> -> vector<128x128xf32>
    %cst_4 = arith.constant 0.000000e+00 : f32
    %4 = vector.broadcast %cst_4 : f32 to vector<128x128xf32>
    %5 = arith.maximumf %3, %4 : vector<128x128xf32>
    %c1 = arith.constant 1 : index
    %c0_5 = arith.constant 0 : index
    %c0_6 = arith.constant 0 : index
    %6 = vector.load %arg1[%c1, %c0_5, %c0_6] : memref<4x128x128xf32, #tpu.memory_space<vmem>>, vector<1x128x128xf32>
    %7 = vector.shape_cast %6 : vector<1x128x128xf32> to vector<128x128xf32>
    %cst_7 = arith.constant dense<0.000000e+00> : vector<128x128xf32>
    %8 = tpu.matmul %7, %5, %cst_7 {dimension_numbers = #tpu.dot_dimension_numbers<[1], [0], [0], [1], [0, 0, 1, 1], [], []>} : vector<128x128xf32>, vector<128x128xf32>, vector<128x128xf32> -> vector<128x128xf32>
    %cst_8 = arith.constant 0.000000e+00 : f32
    %9 = vector.broadcast %cst_8 : f32 to vector<128x128xf32>
    %10 = arith.maximumf %8, %9 : vector<128x128xf32>
    %c2 = arith.constant 2 : index
    %c0_9 = arith.constant 0 : index
    %c0_10 = arith.constant 0 : index
    %11 = vector.load %arg1[%c2, %c0_9, %c0_10] : memref<4x128x128xf32, #tpu.memory_space<vmem>>, vector<1x128x128xf32>
    %12 = vector.shape_cast %11 : vector<1x128x128xf32> to vector<128x128xf32>
    %cst_11 = arith.constant dense<0.000000e+00> : vector<128x128xf32>
    %13 = tpu.matmul %12, %10, %cst_11 {dimension_numbers = #tpu.dot_dimension_numbers<[1], [0], [0], [1], [0, 0, 1, 1], [], []>} : vector<128x128xf32>, vector<128x128xf32>, vector<128x128xf32> -> vector<128x128xf32>
    %cst_12 = arith.constant 0.000000e+00 : f32
    %14 = vector.broadcast %cst_12 : f32 to vector<128x128xf32>
    %15 = arith.maximumf %13, %14 : vector<128x128xf32>
    %16 = tpu.transpose %15, [1, 0] : vector<128x128xf32> -> vector<128x128xf32>
    %17 = vector.extract_strided_slice %16 {offsets = [0, 0], sizes = [64, 128], strides = [1, 1]} : vector<128x128xf32> to vector<64x128xf32>
    %cst_13 = arith.constant dense<0xFF800000> : vector<128xf32>
    %18 = vector.multi_reduction <maximumf>, %17, %cst_13 [0] : vector<64x128xf32> to vector<128xf32>
    %19 = vector.shape_cast %18 : vector<128xf32> to vector<1x128xf32>
    %20 = vector.extract_strided_slice %16 {offsets = [64, 0], sizes = [64, 128], strides = [1, 1]} : vector<128x128xf32> to vector<64x128xf32>
    %cst_14 = arith.constant dense<0xFF800000> : vector<128xf32>
    %21 = vector.multi_reduction <maximumf>, %20, %cst_14 [0] : vector<64x128xf32> to vector<128xf32>
    %22 = vector.shape_cast %21 : vector<128xf32> to vector<1x128xf32>
    %cst_15 = arith.constant 0.000000e+00 : f32
    %23 = vector.broadcast %cst_15 : f32 to vector<6x128xf32>
    %24 = tpu.concatenate %19, %22, %23 in 0 : vector<1x128xf32>, vector<1x128xf32>, vector<6x128xf32> -> vector<8x128xf32>
    %c3 = arith.constant 3 : index
    %c0_16 = arith.constant 0 : index
    %c0_17 = arith.constant 0 : index
    %25 = vector.load %arg1[%c3, %c0_16, %c0_17] : memref<4x128x128xf32, #tpu.memory_space<vmem>>, vector<1x128x128xf32>
    %26 = vector.shape_cast %25 : vector<1x128x128xf32> to vector<128x128xf32>
    %cst_18 = arith.constant dense<0.000000e+00> : vector<8x128xf32>
    %27 = tpu.matmul %24, %26, %cst_18 {dimension_numbers = #tpu.dot_dimension_numbers<[1], [0], [0], [1], [0, 0, 1, 1], [], []>} : vector<8x128xf32>, vector<128x128xf32>, vector<8x128xf32> -> vector<8x128xf32>
    %c0_19 = arith.constant 0 : index
    %c0_20 = arith.constant 0 : index
    %28 = vector.load %arg2[%c0_19, %c0_20] : memref<8x128xf32, #tpu.memory_space<vmem>>, vector<8x128xf32>
    tpu.vector_store %arg2[%c0_19, %c0_20], %27 {strides = array<i32>} : memref<8x128xf32, #tpu.memory_space<vmem>>, vector<8x128xf32>,
    return
  }
}

</mosaic_0001>

<llo_original>
// kernel: unsupervised_meshnet_forward.2
$region0: #{unsupervised_meshnet_forward.2}
  #allocation0 [shape = 'u32[]', space=smem, size = 0x4, offset = 0x4, fixed_abs, tag = 'smem constant byte address 0x4 - core index']
  #allocation1 [shape = 'u32[72,128]{1,0:T(1,128)}', space=vmem, size = 0x9000, scoped, tag = 'internal scratch']
  #allocation2 [shape = 'u32[2048]{0}', space=vmem, size = 0x2000, scoped, tag = 'scoped memory for unsupervised_meshnet_forward.2']
  #allocation3 [shape = 'u32[2048]{0}', space=vmem, size = 0x2000, scoped, tag = 'scoped memory for unsupervised_meshnet_forward.2']
  #allocation4 [shape = 'u32[2048]{0}', space=vmem, size = 0x2000, scoped, tag = 'scoped memory for unsupervised_meshnet_forward.2']
  #allocation5 [shape = 'u32[2048]{0}', space=vmem, size = 0x2000, scoped, tag = 'scoped memory for unsupervised_meshnet_forward.2']
  #allocation6 [shape = 'u32[2048]{0}', space=vmem, size = 0x2000, scoped, tag = 'scoped memory for unsupervised_meshnet_forward.2']
  %s0 = inlined_call_operand.hbm [shape: f32[4,128,128], index: 0, kind: input, shape index: {}]
  %s1 = inlined_call_operand.vmem [shape: f32[3,128], index: 1, kind: input, shape index: {}]
  %s2 = inlined_call_operand.<no memory space> [shape: f32[], index: 2, kind: input, shape index: {}]
  %s3 = inlined_call_operand.vmem [shape: f32[128], index: 3, kind: input, shape index: {}]
  %s4 = inlined_call_operand.vmem [shape: f32[128], index: 4, kind: input, shape index: {}]
  %s5 = inlined_call_operand.vmem [shape: f32[8,128], index: 5, kind: output, shape index: {}]
  %s6 = sld [smem:[#allocation0]]
  $region30: #{unsupervised_meshnet_forward.2} parent=0
    _
  %s8 = ssub.s32 1, %s6
  %s9 = scalar_select 0, %s8, %s6
  %v10 = vstv %s2
  $region1: #{unsupervised_meshnet_forward.2} parent=0
    #allocation7 [shape = 'u8[262144]{0}', space=vmem, size = 0x40000, scoped, tag = 'input window, operand 1, single buffered']
    #allocation8 [shape = 's32[1]{0}', space=sflag, size = 0x4, scoped, tag = 'scoped memory for unsupervised_meshnet_forward.2']
    #allocation9 [shape = 'u8[65536]{0}', space=vmem, size = 0x10000, dematerialized = true, scoped, tag = 'FusionAdapter Buffer %fusion.1 = f32[128,128]{1,0:T(8,128)} fusion(%param_1.12, %param_2.7, %param_3.5, %param_4.2), kind=kLoop, calls=%fused_computation.1.clone, metadata={op_name="jit(unsupervised_meshnet_forward)/concatenate" stack_frame_id=10}']
    %11 = vsyncpa [#allocation8], 0
    // Predicated region
    $region2: #{unsupervised_meshnet_forward.2} parent=1 // pred_check
      _
    $region3: #{unsupervised_meshnet_forward.2} parent=1 // pred_check_branch
      %13 = sbr.rel (0) target = $region5
    $region4: #{unsupervised_meshnet_forward.2} parent=1 // pred_region
      _
    $region5: #{unsupervised_meshnet_forward.2} parent=1 // pred_fallthru
      _
    // Predicated region
    $region6: #{unsupervised_meshnet_forward.2} parent=1 // pred_check
      _
    $region7: #{unsupervised_meshnet_forward.2} parent=1 // pred_check_branch
      %15 = sbr.rel (0) target = $region9
    $region8: #{unsupervised_meshnet_forward.2} parent=1 // pred_region
      _
    $region9: #{unsupervised_meshnet_forward.2} parent=1 // pred_fallthru
      _
    // Predicated region
    $region10: #{unsupervised_meshnet_forward.2} parent=1 // pred_check
      _
    $region11: #{unsupervised_meshnet_forward.2} parent=1 // pred_check_branch
      %17 = sbr.rel (0) target = $region13
    $region12: #{unsupervised_meshnet_forward.2} parent=1 // pred_region
      _
    $region13: #{unsupervised_meshnet_forward.2} parent=1 // pred_fallthru
      _
    // Predicated region
    $region14: #{unsupervised_meshnet_forward.2} parent=1 // pred_check
      _
    $region15: #{unsupervised_meshnet_forward.2} parent=1 // pred_check_branch
      %19 = sbr.rel (0) target = $region17
    $region16: #{unsupervised_meshnet_forward.2} parent=1 // pred_region
      %21 = vsyncadd [#allocation8], 0
      %s22 = sshll.u32 %s0, 4
      %s23 = int_to_ptr.hbm [resolvable:$true] %s22
      %s24 = sshll.u32 [#allocation7], 4
      %s25 = int_to_ptr.vmem [resolvable:$true] %s24
      %30 = dma.hbm_to_vmem [thread:$0]  %s23, 8192, %s25, [#allocation8], 128, 128, 8
    $region17: #{unsupervised_meshnet_forward.2} parent=1 // pred_fallthru
      _
    // Predicated region
    $region18: #{unsupervised_meshnet_forward.2} parent=1 // pred_check
      _
    $region19: #{unsupervised_meshnet_forward.2} parent=1 // pred_check_branch
      %32 = sbr.rel (0) target = $region21
    $region20: #{unsupervised_meshnet_forward.2} parent=1 // pred_region
      %34 = dma.done [#allocation8], 8192
    $region21: #{unsupervised_meshnet_forward.2} parent=1 // pred_fallthru
      _
    %v35 = vld [vmem:[%s1] sm:$0x7]
    %v36 = vlaneseq
    %v37 = vshrl.u32 %v36, 7
    %vm39 = vcmp.lt.s32.totalorder %v37, 3
    %v40 = vsel %vm39, %v35, %v10
    %v41 = vld [vmem:[%s3] ss:$0 sm:$0xff]
    %v42 = vlaneseq
    %v43 = vshrl.u32 %v42, 7
    %45 = vset.pattern.permute.xlu0 %v43
    %46 = vperm.xlu0 %45, %v41
    %v47 = vpop.permute.xlu0 %46
    %v48 = vld [vmem:[%s4] ss:$0 sm:$0xff]
    %v49 = vlaneseq
    %v50 = vshrl.u32 %v49, 7
    %52 = vset.pattern.permute.xlu0 %v50
    %53 = vperm.xlu0 %52, %v48
    %v54 = vpop.permute.xlu0 %53
    %55 = xla_tuple %v40, %v54
    %56 = xla_tuple %55
    %v57 = vmax.f32 %v40, %v54
    %58 = xla_tuple %v57
    %59 = xla_tuple %v57, %v47
    %60 = xla_tuple %59
    %v61 = vmax.f32 %v57, %v47
    %62 = xla_tuple %v61
    %s64 = ssub.s32 256, 1
    %65 = vst [vmem:[#allocation9] sm:%s64] %v61
    %v66 = vld [vmem:[%s3] ss:$0 sm:$0xff]
    %v67 = vlaneseq
    %v68 = vshrl.u32 %v67, 7
    %v69 = vadd.s32 %v68, 8
    %70 = vset.pattern.permute.xlu0 %v69
    %71 = vperm.xlu0 %70, %v66
    %v72 = vpop.permute.xlu0 %71
    %v73 = vld [vmem:[%s4] ss:$0 sm:$0xff]
    %v74 = vlaneseq
    %v75 = vshrl.u32 %v74, 7
    %v76 = vadd.s32 %v75, 8
    %77 = vset.pattern.permute.xlu0 %v76
    %78 = vperm.xlu0 %77, %v73
    %v79 = vpop.permute.xlu0 %78
    %80 = xla_tuple %v10, %v79
    %81 = xla_tuple %80
    %v82 = vmax.f32 %v10, %v79
    %83 = xla_tuple %v82
    %84 = xla_tuple %v82, %v72
    %85 = xla_tuple %84
    %v86 = vmax.f32 %v82, %v72
    %87 = xla_tuple %v86
    %s88 = scalar_lea.vmem [#allocation9], 8
    %s90 = ssub.s32 256, 1
    %91 = vst [vmem:[%s88] sm:%s90] %v86
    %v92 = vld [vmem:[%s3] ss:$0 sm:$0xff]
    %v93 = vlaneseq
    %v94 = vshrl.u32 %v93, 7
    %v95 = vadd.s32 %v94, 16
    %96 = vset.pattern.permute.xlu0 %v95
    %97 = vperm.xlu0 %96, %v92
    %v98 = vpop.permute.xlu0 %97
    %v99 = vld [vmem:[%s4] ss:$0 sm:$0xff]
    %v100 = vlaneseq
    %v101 = vshrl.u32 %v100, 7
    %v102 = vadd.s32 %v101, 16
    %103 = vset.pattern.permute.xlu0 %v102
    %104 = vperm.xlu0 %103, %v99
    %v105 = vpop.permute.xlu0 %104
    %106 = xla_tuple %v10, %v105
    %107 = xla_tuple %106
    %v108 = vmax.f32 %v10, %v105
    %109 = xla_tuple %v108
    %110 = xla_tuple %v108, %v98
    %111 = xla_tuple %110
    %v112 = vmax.f32 %v108, %v98
    %113 = xla_tuple %v112
    %s114 = scalar_lea.vmem [#allocation9], 16
    %s116 = ssub.s32 256, 1
    %117 = vst [vmem:[%s114] sm:%s116] %v112
    %v118 = vld [vmem:[%s3] ss:$0 sm:$0xff]
    %v119 = vlaneseq
    %v120 = vshrl.u32 %v119, 7
    %v121 = vadd.s32 %v120, 24
    %122 = vset.pattern.permute.xlu0 %v121
    %123 = vperm.xlu0 %122, %v118
    %v124 = vpop.permute.xlu0 %123
    %v125 = vld [vmem:[%s4] ss:$0 sm:$0xff]
    %v126 = vlaneseq
    %v127 = vshrl.u32 %v126, 7
    %v128 = vadd.s32 %v127, 24
    %129 = vset.pattern.permute.xlu0 %v128
    %130 = vperm.xlu0 %129, %v125
    %v131 = vpop.permute.xlu0 %130
    %132 = xla_tuple %v10, %v131
    %133 = xla_tuple %132
    %v134 = vmax.f32 %v10, %v131
    %135 = xla_tuple %v134
    %136 = xla_tuple %v134, %v124
    %137 = xla_tuple %136
    %v138 = vmax.f32 %v134, %v124
    %139 = xla_tuple %v138
    %s140 = scalar_lea.vmem [#allocation9], 24
    %s142 = ssub.s32 256, 1
    %143 = vst [vmem:[%s140] sm:%s142] %v138
    %v144 = vld [vmem:[%s3] ss:$0 sm:$0xff]
    %v145 = vlaneseq
    %v146 = vshrl.u32 %v145, 7
    %v147 = vadd.s32 %v146, 32
    %148 = vset.pattern.permute.xlu0 %v147
    %149 = vperm.xlu0 %148, %v144
    %v150 = vpop.permute.xlu0 %149
    %v151 = vld [vmem:[%s4] ss:$0 sm:$0xff]
    %v152 = vlaneseq
    %v153 = vshrl.u32 %v152, 7
    %v154 = vadd.s32 %v153, 32
    %155 = vset.pattern.permute.xlu0 %v154
    %156 = vperm.xlu0 %155, %v151
    %v157 = vpop.permute.xlu0 %156
    %158 = xla_tuple %v10, %v157
    %159 = xla_tuple %158
    %v160 = vmax.f32 %v10, %v157
    %161 = xla_tuple %v160
    %162 = xla_tuple %v160, %v150
    %163 = xla_tuple %162
    %v164 = vmax.f32 %v160, %v150
    %165 = xla_tuple %v164
    %s166 = scalar_lea.vmem [#allocation9], 32
    %s168 = ssub.s32 256, 1
    %169 = vst [vmem:[%s166] sm:%s168] %v164
    %v170 = vld [vmem:[%s3] ss:$0 sm:$0xff]
    %v171 = vlaneseq
    %v172 = vshrl.u32 %v171, 7
    %v173 = vadd.s32 %v172, 40
    %174 = vset.pattern.permute.xlu0 %v173
    %175 = vperm.xlu0 %174, %v170
    %v176 = vpop.permute.xlu0 %175
    %v177 = vld [vmem:[%s4] ss:$0 sm:$0xff]
    %v178 = vlaneseq
    %v179 = vshrl.u32 %v178, 7
    %v180 = vadd.s32 %v179, 40
    %181 = vset.pattern.permute.xlu0 %v180
    %182 = vperm.xlu0 %181, %v177
    %v183 = vpop.permute.xlu0 %182
    %184 = xla_tuple %v10, %v183
    %185 = xla_tuple %184
    %v186 = vmax.f32 %v10, %v183
    %187 = xla_tuple %v186
    %188 = xla_tuple %v186, %v176
    %189 = xla_tuple %188
    %v190 = vmax.f32 %v186, %v176
    %191 = xla_tuple %v190
    %s192 = scalar_lea.vmem [#allocation9], 40
    %s194 = ssub.s32 256, 1
    %195 = vst [vmem:[%s192] sm:%s194] %v190
    %v196 = vld [vmem:[%s3] ss:$0 sm:$0xff]
    %v197 = vlaneseq
    %v198 = vshrl.u32 %v197, 7
    %v199 = vadd.s32 %v198, 48
    %200 = vset.pattern.permute.xlu0 %v199
    %201 = vperm.xlu0 %200, %v196
    %v202 = vpop.permute.xlu0 %201
    %v203 = vld [vmem:[%s4] ss:$0 sm:$0xff]
    %v204 = vlaneseq
    %v205 = vshrl.u32 %v204, 7
    %v206 = vadd.s32 %v205, 48
    %207 = vset.pattern.permute.xlu0 %v206
    %208 = vperm.xlu0 %207, %v203
    %v209 = vpop.permute.xlu0 %208
    %210 = xla_tuple %v10, %v209
    %211 = xla_tuple %210
    %v212 = vmax.f32 %v10, %v209
    %213 = xla_tuple %v212
    %214 = xla_tuple %v212, %v202
    %215 = xla_tuple %214
    %v216 = vmax.f32 %v212, %v202
    %217 = xla_tuple %v216
    %s218 = scalar_lea.vmem [#allocation9], 48
    %s220 = ssub.s32 256, 1
    %221 = vst [vmem:[%s218] sm:%s220] %v216
    %v222 = vld [vmem:[%s3] ss:$0 sm:$0xff]
    %v223 = vlaneseq
    %v224 = vshrl.u32 %v223, 7
    %v225 = vadd.s32 %v224, 56
    %226 = vset.pattern.permute.xlu0 %v225
    %227 = vperm.xlu0 %226, %v222
    %v228 = vpop.permute.xlu0 %227
    %v229 = vld [vmem:[%s4] ss:$0 sm:$0xff]
    %v230 = vlaneseq
    %v231 = vshrl.u32 %v230, 7
    %v232 = vadd.s32 %v231, 56
    %233 = vset.pattern.permute.xlu0 %v232
    %234 = vperm.xlu0 %233, %v229
    %v235 = vpop.permute.xlu0 %234
    %236 = xla_tuple %v10, %v235
    %237 = xla_tuple %236
    %v238 = vmax.f32 %v10, %v235
    %239 = xla_tuple %v238
    %240 = xla_tuple %v238, %v228
    %241 = xla_tuple %240
    %v242 = vmax.f32 %v238, %v228
    %243 = xla_tuple %v242
    %s244 = scalar_lea.vmem [#allocation9], 56
    %s246 = ssub.s32 256, 1
    %247 = vst [vmem:[%s244] sm:%s246] %v242
    %v248 = vld [vmem:[%s3] ss:$0 sm:$0xff]
    %v249 = vlaneseq
    %v250 = vshrl.u32 %v249, 7
    %v251 = vadd.s32 %v250, 64
    %252 = vset.pattern.permute.xlu0 %v251
    %253 = vperm.xlu0 %252, %v248
    %v254 = vpop.permute.xlu0 %253
    %v255 = vld [vmem:[%s4] ss:$0 sm:$0xff]
    %v256 = vlaneseq
    %v257 = vshrl.u32 %v256, 7
    %v258 = vadd.s32 %v257, 64
    %259 = vset.pattern.permute.xlu0 %v258
    %260 = vperm.xlu0 %259, %v255
    %v261 = vpop.permute.xlu0 %260
    %262 = xla_tuple %v10, %v261
    %263 = xla_tuple %262
    %v264 = vmax.f32 %v10, %v261
    %265 = xla_tuple %v264
    %266 = xla_tuple %v264, %v254
    %267 = xla_tuple %266
    %v268 = vmax.f32 %v264, %v254
    %269 = xla_tuple %v268
    %s270 = scalar_lea.vmem [#allocation9], 64
    %s272 = ssub.s32 256, 1
    %273 = vst [vmem:[%s270] sm:%s272] %v268
    %v274 = vld [vmem:[%s3] ss:$0 sm:$0xff]
    %v275 = vlaneseq
    %v276 = vshrl.u32 %v275, 7
    %v277 = vadd.s32 %v276, 72
    %278 = vset.pattern.permute.xlu0 %v277
    %279 = vperm.xlu0 %278, %v274
    %v280 = vpop.permute.xlu0 %279
    %v281 = vld [vmem:[%s4] ss:$0 sm:$0xff]
    %v282 = vlaneseq
    %v283 = vshrl.u32 %v282, 7
    %v284 = vadd.s32 %v283, 72
    %285 = vset.pattern.permute.xlu0 %v284
    %286 = vperm.xlu0 %285, %v281
    %v287 = vpop.permute.xlu0 %286
    %288 = xla_tuple %v10, %v287
    %289 = xla_tuple %288
    %v290 = vmax.f32 %v10, %v287
    %291 = xla_tuple %v290
    %292 = xla_tuple %v290, %v280
    %293 = xla_tuple %292
    %v294 = vmax.f32 %v290, %v280
    %295 = xla_tuple %v294
    %s296 = scalar_lea.vmem [#allocation9], 72
    %s298 = ssub.s32 256, 1
    %299 = vst [vmem:[%s296] sm:%s298] %v294
    %v300 = vld [vmem:[%s3] ss:$0 sm:$0xff]
    %v301 = vlaneseq
    %v302 = vshrl.u32 %v301, 7
    %v303 = vadd.s32 %v302, 80
    %304 = vset.pattern.permute.xlu0 %v303
    %305 = vperm.xlu0 %304, %v300
    %v306 = vpop.permute.xlu0 %305
    %v307 = vld [vmem:[%s4] ss:$0 sm:$0xff]
    %v308 = vlaneseq
    %v309 = vshrl.u32 %v308, 7
    %v310 = vadd.s32 %v309, 80
    %311 = vset.pattern.permute.xlu0 %v310
    %312 = vperm.xlu0 %311, %v307
    %v313 = vpop.permute.xlu0 %312
    %314 = xla_tuple %v10, %v313
    %315 = xla_tuple %314
    %v316 = vmax.f32 %v10, %v313
    %317 = xla_tuple %v316
    %318 = xla_tuple %v316, %v306
    %319 = xla_tuple %318
    %v320 = vmax.f32 %v316, %v306
    %321 = xla_tuple %v320
    %s322 = scalar_lea.vmem [#allocation9], 80
    %s324 = ssub.s32 256, 1
    %325 = vst [vmem:[%s322] sm:%s324] %v320
    %v326 = vld [vmem:[%s3] ss:$0 sm:$0xff]
    %v327 = vlaneseq
    %v328 = vshrl.u32 %v327, 7
    %v329 = vadd.s32 %v328, 88
    %330 = vset.pattern.permute.xlu0 %v329
    %331 = vperm.xlu0 %330, %v326
    %v332 = vpop.permute.xlu0 %331
    %v333 = vld [vmem:[%s4] ss:$0 sm:$0xff]
    %v334 = vlaneseq
    %v335 = vshrl.u32 %v334, 7
    %v336 = vadd.s32 %v335, 88
    %337 = vset.pattern.permute.xlu0 %v336
    %338 = vperm.xlu0 %337, %v333
    %v339 = vpop.permute.xlu0 %338
    %340 = xla_tuple %v10, %v339
    %341 = xla_tuple %340
    %v342 = vmax.f32 %v10, %v339
    %343 = xla_tuple %v342
    %344 = xla_tuple %v342, %v332
    %345 = xla_tuple %344
    %v346 = vmax.f32 %v342, %v332
    %347 = xla_tuple %v346
    %s348 = scalar_lea.vmem [#allocation9], 88
    %s350 = ssub.s32 256, 1
    %351 = vst [vmem:[%s348] sm:%s350] %v346
    %v352 = vld [vmem:[%s3] ss:$0 sm:$0xff]
    %v353 = vlaneseq
    %v354 = vshrl.u32 %v353, 7
    %v355 = vadd.s32 %v354, 96
    %356 = vset.pattern.permute.xlu0 %v355
    %357 = vperm.xlu0 %356, %v352
    %v358 = vpop.permute.xlu0 %357
    %v359 = vld [vmem:[%s4] ss:$0 sm:$0xff]
    %v360 = vlaneseq
    %v361 = vshrl.u32 %v360, 7
    %v362 = vadd.s32 %v361, 96
    %363 = vset.pattern.permute.xlu0 %v362
    %364 = vperm.xlu0 %363, %v359
    %v365 = vpop.permute.xlu0 %364
    %366 = xla_tuple %v10, %v365
    %367 = xla_tuple %366
    %v368 = vmax.f32 %v10, %v365
    %369 = xla_tuple %v368
    %370 = xla_tuple %v368, %v358
    %371 = xla_tuple %370
    %v372 = vmax.f32 %v368, %v358
    %373 = xla_tuple %v372
    %s374 = scalar_lea.vmem [#allocation9], 96
    %s376 = ssub.s32 256, 1
    %377 = vst [vmem:[%s374] sm:%s376] %v372
    %v378 = vld [vmem:[%s3] ss:$0 sm:$0xff]
    %v379 = vlaneseq
    %v380 = vshrl.u32 %v379, 7
    %v381 = vadd.s32 %v380, 104
    %382 = vset.pattern.permute.xlu0 %v381
    %383 = vperm.xlu0 %382, %v378
    %v384 = vpop.permute.xlu0 %383
    %v385 = vld [vmem:[%s4] ss:$0 sm:$0xff]
    %v386 = vlaneseq
    %v387 = vshrl.u32 %v386, 7
    %v388 = vadd.s32 %v387, 104
    %389 = vset.pattern.permute.xlu0 %v388
    %390 = vperm.xlu0 %389, %v385
    %v391 = vpop.permute.xlu0 %390
    %392 = xla_tuple %v10, %v391
    %393 = xla_tuple %392
    %v394 = vmax.f32 %v10, %v391
    %395 = xla_tuple %v394
    %396 = xla_tuple %v394, %v384
    %397 = xla_tuple %396
    %v398 = vmax.f32 %v394, %v384
    %399 = xla_tuple %v398
    %s400 = scalar_lea.vmem [#allocation9], 104
    %s402 = ssub.s32 256, 1
    %403 = vst [vmem:[%s400] sm:%s402] %v398
    %v404 = vld [vmem:[%s3] ss:$0 sm:$0xff]
    %v405 = vlaneseq
    %v406 = vshrl.u32 %v405, 7
    %v407 = vadd.s32 %v406, 112
    %408 = vset.pattern.permute.xlu0 %v407
    %409 = vperm.xlu0 %408, %v404
    %v410 = vpop.permute.xlu0 %409
    %v411 = vld [vmem:[%s4] ss:$0 sm:$0xff]
    %v412 = vlaneseq
    %v413 = vshrl.u32 %v412, 7
    %v414 = vadd.s32 %v413, 112
    %415 = vset.pattern.permute.xlu0 %v414
    %416 = vperm.xlu0 %415, %v411
    %v417 = vpop.permute.xlu0 %416
    %418 = xla_tuple %v10, %v417
    %419 = xla_tuple %418
    %v420 = vmax.f32 %v10, %v417
    %421 = xla_tuple %v420
    %422 = xla_tuple %v420, %v410
    %423 = xla_tuple %422
    %v424 = vmax.f32 %v420, %v410
    %425 = xla_tuple %v424
    %s426 = scalar_lea.vmem [#allocation9], 112
    %s428 = ssub.s32 256, 1
    %429 = vst [vmem:[%s426] sm:%s428] %v424
    %v430 = vld [vmem:[%s3] ss:$0 sm:$0xff]
    %v431 = vlaneseq
    %v432 = vshrl.u32 %v431, 7
    %v433 = vadd.s32 %v432, 120
    %434 = vset.pattern.permute.xlu0 %v433
    %435 = vperm.xlu0 %434, %v430
    %v436 = vpop.permute.xlu0 %435
    %v437 = vld [vmem:[%s4] ss:$0 sm:$0xff]
    %v438 = vlaneseq
    %v439 = vshrl.u32 %v438, 7
    %v440 = vadd.s32 %v439, 120
    %441 = vset.pattern.permute.xlu0 %v440
    %442 = vperm.xlu0 %441, %v437
    %v443 = vpop.permute.xlu0 %442
    %444 = xla_tuple %v10, %v443
    %445 = xla_tuple %444
    %v446 = vmax.f32 %v10, %v443
    %447 = xla_tuple %v446
    %448 = xla_tuple %v446, %v436
    %449 = xla_tuple %448
    %v450 = vmax.f32 %v446, %v436
    %451 = xla_tuple %v450
    %s452 = scalar_lea.vmem [#allocation9], 120
    %s454 = ssub.s32 256, 1
    %455 = vst [vmem:[%s452] sm:%s454] %v450
    %v456 = vld [vmem:[#allocation9] sm:$0xff]
    %v457 = vld [vmem:[#allocation9 + $0x8] sm:$0xff]
    %v458 = vld [vmem:[#allocation9 + $0x10] sm:$0xff]
    %v459 = vld [vmem:[#allocation9 + $0x18] sm:$0xff]
    %v460 = vld [vmem:[#allocation9 + $0x20] sm:$0xff]
    %v461 = vld [vmem:[#allocation9 + $0x28] sm:$0xff]
    %v462 = vld [vmem:[#allocation9 + $0x30] sm:$0xff]
    %v463 = vld [vmem:[#allocation9 + $0x38] sm:$0xff]
    %v464 = vld [vmem:[#allocation9 + $0x40] sm:$0xff]
    %v465 = vld [vmem:[#allocation9 + $0x48] sm:$0xff]
    %v466 = vld [vmem:[#allocation9 + $0x50] sm:$0xff]
    %v467 = vld [vmem:[#allocation9 + $0x58] sm:$0xff]
    %v468 = vld [vmem:[#allocation9 + $0x60] sm:$0xff]
    %v469 = vld [vmem:[#allocation9 + $0x68] sm:$0xff]
    %v470 = vld [vmem:[#allocation9 + $0x70] sm:$0xff]
    %v471 = vld [vmem:[#allocation9 + $0x78] sm:$0xff]
    %v472 = vld [vmem:[#allocation7] sm:$0xff]
    %v473 = vld [vmem:[#allocation7 + $0x8] sm:$0xff]
    %v474 = vld [vmem:[#allocation7 + $0x10] sm:$0xff]
    %v475 = vld [vmem:[#allocation7 + $0x18] sm:$0xff]
    %v476 = vld [vmem:[#allocation7 + $0x20] sm:$0xff]
    %v477 = vld [vmem:[#allocation7 + $0x28] sm:$0xff]
    %v478 = vld [vmem:[#allocation7 + $0x30] sm:$0xff]
    %v479 = vld [vmem:[#allocation7 + $0x38] sm:$0xff]
    %v480 = vld [vmem:[#allocation7 + $0x40] sm:$0xff]
    %v481 = vld [vmem:[#allocation7 + $0x48] sm:$0xff]
    %v482 = vld [vmem:[#allocation7 + $0x50] sm:$0xff]
    %v483 = vld [vmem:[#allocation7 + $0x58] sm:$0xff]
    %v484 = vld [vmem:[#allocation7 + $0x60] sm:$0xff]
    %v485 = vld [vmem:[#allocation7 + $0x68] sm:$0xff]
    %v486 = vld [vmem:[#allocation7 + $0x70] sm:$0xff]
    %v487 = vld [vmem:[#allocation7 + $0x78] sm:$0xff]
    %488 = vmatpush.msra.mxu0 %v471
    %489 = vmatpush.msra.mxu0 %v470
    %490 = vmatpush.msra.mxu0 %v469
    %491 = vmatpush.msra.mxu0 %v468
    %492 = vmatpush.msra.mxu0 %v467
    %493 = vmatpush.msra.mxu0 %v466
    %494 = vmatpush.msra.mxu0 %v465
    %495 = vmatpush.msra.mxu0 %v464
    %496 = vmatpush.msra.mxu0 %v463
    %497 = vmatpush.msra.mxu0 %v462
    %498 = vmatpush.msra.mxu0 %v461
    %499 = vmatpush.msra.mxu0 %v460
    %500 = vmatpush.msra.mxu0 %v459
    %501 = vmatpush.msra.mxu0 %v458
    %502 = vmatpush.msra.mxu0 %v457
    %503 = vmatpush.msra.mxu0 %v456
    %504 = vmatmul.f32.gmra.mxu0 %v472
    %v505 = vpop.f32.mrf.mxu0
    %v506 = vadd.f32 0.0, %v505
    %507 = vmatmul.f32.gmra.mxu0 %v473
    %v508 = vpop.f32.mrf.mxu0
    %v509 = vadd.f32 0.0, %v508
    %510 = vmatmul.f32.gmra.mxu0 %v474
    %v511 = vpop.f32.mrf.mxu0
    %v512 = vadd.f32 0.0, %v511
    %513 = vmatmul.f32.gmra.mxu0 %v475
    %v514 = vpop.f32.mrf.mxu0
    %v515 = vadd.f32 0.0, %v514
    %516 = vmatmul.f32.gmra.mxu0 %v476
    %v517 = vpop.f32.mrf.mxu0
    %v518 = vadd.f32 0.0, %v517
    %519 = vmatmul.f32.gmra.mxu0 %v477
    %v520 = vpop.f32.mrf.mxu0
    %v521 = vadd.f32 0.0, %v520
    %522 = vmatmul.f32.gmra.mxu0 %v478
    %v523 = vpop.f32.mrf.mxu0
    %v524 = vadd.f32 0.0, %v523
    %525 = vmatmul.f32.gmra.mxu0 %v479
    %v526 = vpop.f32.mrf.mxu0
    %v527 = vadd.f32 0.0, %v526
    %528 = vmatmul.f32.gmra.mxu0 %v480
    %v529 = vpop.f32.mrf.mxu0
    %v530 = vadd.f32 0.0, %v529
    %531 = vmatmul.f32.gmra.mxu0 %v481
    %v532 = vpop.f32.mrf.mxu0
    %v533 = vadd.f32 0.0, %v532
    %534 = vmatmul.f32.gmra.mxu0 %v482
    %v535 = vpop.f32.mrf.mxu0
    %v536 = vadd.f32 0.0, %v535
    %537 = vmatmul.f32.gmra.mxu0 %v483
    %v538 = vpop.f32.mrf.mxu0
    %v539 = vadd.f32 0.0, %v538
    %540 = vmatmul.f32.gmra.mxu0 %v484
    %v541 = vpop.f32.mrf.mxu0
    %v542 = vadd.f32 0.0, %v541
    %543 = vmatmul.f32.gmra.mxu0 %v485
    %v544 = vpop.f32.mrf.mxu0
    %v545 = vadd.f32 0.0, %v544
    %546 = vmatmul.f32.gmra.mxu0 %v486
    %v547 = vpop.f32.mrf.mxu0
    %v548 = vadd.f32 0.0, %v547
    %549 = vmatmul.f32.gmra.mxu0 %v487
    %v550 = vpop.f32.mrf.mxu0
    %v551 = vadd.f32 0.0, %v550
    %552 = vdwg.mxu0
    %v553 = vmax.f32 %v506, 0.0
    %v554 = vmax.f32 %v509, 0.0
    %v555 = vmax.f32 %v512, 0.0
    %v556 = vmax.f32 %v515, 0.0
    %v557 = vmax.f32 %v518, 0.0
    %v558 = vmax.f32 %v521, 0.0
    %v559 = vmax.f32 %v524, 0.0
    %v560 = vmax.f32 %v527, 0.0
    %v561 = vmax.f32 %v530, 0.0
    %v562 = vmax.f32 %v533, 0.0
    %v563 = vmax.f32 %v536, 0.0
    %v564 = vmax.f32 %v539, 0.0
    %v565 = vmax.f32 %v542, 0.0
    %v566 = vmax.f32 %v545, 0.0
    %v567 = vmax.f32 %v548, 0.0
    %v568 = vmax.f32 %v551, 0.0
    %s569 = scalar_lea.vmem [#allocation7], 128
    %v570 = vld [vmem:[%s569] sm:$0xff]
    %v571 = vld [vmem:[%s569 + $0x8] sm:$0xff]
    %v572 = vld [vmem:[%s569 + $0x10] sm:$0xff]
    %v573 = vld [vmem:[%s569 + $0x18] sm:$0xff]
    %v574 = vld [vmem:[%s569 + $0x20] sm:$0xff]
    %v575 = vld [vmem:[%s569 + $0x28] sm:$0xff]
    %v576 = vld [vmem:[%s569 + $0x30] sm:$0xff]
    %v577 = vld [vmem:[%s569 + $0x38] sm:$0xff]
    %v578 = vld [vmem:[%s569 + $0x40] sm:$0xff]
    %v579 = vld [vmem:[%s569 + $0x48] sm:$0xff]
    %v580 = vld [vmem:[%s569 + $0x50] sm:$0xff]
    %v581 = vld [vmem:[%s569 + $0x58] sm:$0xff]
    %v582 = vld [vmem:[%s569 + $0x60] sm:$0xff]
    %v583 = vld [vmem:[%s569 + $0x68] sm:$0xff]
    %v584 = vld [vmem:[%s569 + $0x70] sm:$0xff]
    %v585 = vld [vmem:[%s569 + $0x78] sm:$0xff]
    %586 = vmatpush.msra.mxu0 %v568
    %587 = vmatpush.msra.mxu0 %v567
    %588 = vmatpush.msra.mxu0 %v566
    %589 = vmatpush.msra.mxu0 %v565
    %590 = vmatpush.msra.mxu0 %v564
    %591 = vmatpush.msra.mxu0 %v563
    %592 = vmatpush.msra.mxu0 %v562
    %593 = vmatpush.msra.mxu0 %v561
    %594 = vmatpush.msra.mxu0 %v560
    %595 = vmatpush.msra.mxu0 %v559
    %596 = vmatpush.msra.mxu0 %v558
    %597 = vmatpush.msra.mxu0 %v557
    %598 = vmatpush.msra.mxu0 %v556
    %599 = vmatpush.msra.mxu0 %v555
    %600 = vmatpush.msra.mxu0 %v554
    %601 = vmatpush.msra.mxu0 %v553
    %602 = vmatmul.f32.gmra.mxu0 %v570
    %v603 = vpop.f32.mrf.mxu0
    %v604 = vadd.f32 0.0, %v603
    %605 = vmatmul.f32.gmra.mxu0 %v571
    %v606 = vpop.f32.mrf.mxu0
    %v607 = vadd.f32 0.0, %v606
    %608 = vmatmul.f32.gmra.mxu0 %v572
    %v609 = vpop.f32.mrf.mxu0
    %v610 = vadd.f32 0.0, %v609
    %611 = vmatmul.f32.gmra.mxu0 %v573
    %v612 = vpop.f32.mrf.mxu0
    %v613 = vadd.f32 0.0, %v612
    %614 = vmatmul.f32.gmra.mxu0 %v574
    %v615 = vpop.f32.mrf.mxu0
    %v616 = vadd.f32 0.0, %v615
    %617 = vmatmul.f32.gmra.mxu0 %v575
    %v618 = vpop.f32.mrf.mxu0
    %v619 = vadd.f32 0.0, %v618
    %620 = vmatmul.f32.gmra.mxu0 %v576
    %v621 = vpop.f32.mrf.mxu0
    %v622 = vadd.f32 0.0, %v621
    %623 = vmatmul.f32.gmra.mxu0 %v577
    %v624 = vpop.f32.mrf.mxu0
    %v625 = vadd.f32 0.0, %v624
    %626 = vmatmul.f32.gmra.mxu0 %v578
    %v627 = vpop.f32.mrf.mxu0
    %v628 = vadd.f32 0.0, %v627
    %629 = vmatmul.f32.gmra.mxu0 %v579
    %v630 = vpop.f32.mrf.mxu0
    %v631 = vadd.f32 0.0, %v630
    %632 = vmatmul.f32.gmra.mxu0 %v580
    %v633 = vpop.f32.mrf.mxu0
    %v634 = vadd.f32 0.0, %v633
    %635 = vmatmul.f32.gmra.mxu0 %v581
    %v636 = vpop.f32.mrf.mxu0
    %v637 = vadd.f32 0.0, %v636
    %638 = vmatmul.f32.gmra.mxu0 %v582
    %v639 = vpop.f32.mrf.mxu0
    %v640 = vadd.f32 0.0, %v639
    %641 = vmatmul.f32.gmra.mxu0 %v583
    %v642 = vpop.f32.mrf.mxu0
    %v643 = vadd.f32 0.0, %v642
    %644 = vmatmul.f32.gmra.mxu0 %v584
    %v645 = vpop.f32.mrf.mxu0
    %v646 = vadd.f32 0.0, %v645
    %647 = vmatmul.f32.gmra.mxu0 %v585
    %v648 = vpop.f32.mrf.mxu0
    %v649 = vadd.f32 0.0, %v648
    %650 = vdwg.mxu0
    %v651 = vmax.f32 %v604, 0.0
    %v652 = vmax.f32 %v607, 0.0
    %v653 = vmax.f32 %v610, 0.0
    %v654 = vmax.f32 %v613, 0.0
    %v655 = vmax.f32 %v616, 0.0
    %v656 = vmax.f32 %v619, 0.0
    %v657 = vmax.f32 %v622, 0.0
    %v658 = vmax.f32 %v625, 0.0
    %v659 = vmax.f32 %v628, 0.0
    %v660 = vmax.f32 %v631, 0.0
    %v661 = vmax.f32 %v634, 0.0
    %v662 = vmax.f32 %v637, 0.0
    %v663 = vmax.f32 %v640, 0.0
    %v664 = vmax.f32 %v643, 0.0
    %v665 = vmax.f32 %v646, 0.0
    %v666 = vmax.f32 %v649, 0.0
    %s667 = scalar_lea.vmem [#allocation7], 256
    %v668 = vld [vmem:[%s667] sm:$0xff]
    %v669 = vld [vmem:[%s667 + $0x8] sm:$0xff]
    %v670 = vld [vmem:[%s667 + $0x10] sm:$0xff]
    %v671 = vld [vmem:[%s667 + $0x18] sm:$0xff]
    %v672 = vld [vmem:[%s667 + $0x20] sm:$0xff]
    %v673 = vld [vmem:[%s667 + $0x28] sm:$0xff]
    %v674 = vld [vmem:[%s667 + $0x30] sm:$0xff]
    %v675 = vld [vmem:[%s667 + $0x38] sm:$0xff]
    %v676 = vld [vmem:[%s667 + $0x40] sm:$0xff]
    %v677 = vld [vmem:[%s667 + $0x48] sm:$0xff]
    %v678 = vld [vmem:[%s667 + $0x50] sm:$0xff]
    %v679 = vld [vmem:[%s667 + $0x58] sm:$0xff]
    %v680 = vld [vmem:[%s667 + $0x60] sm:$0xff]
    %v681 = vld [vmem:[%s667 + $0x68] sm:$0xff]
    %v682 = vld [vmem:[%s667 + $0x70] sm:$0xff]
    %v683 = vld [vmem:[%s667 + $0x78] sm:$0xff]
    %684 = vmatpush.msra.mxu0 %v666
    %685 = vmatpush.msra.mxu0 %v665
    %686 = vmatpush.msra.mxu0 %v664
    %687 = vmatpush.msra.mxu0 %v663
    %688 = vmatpush.msra.mxu0 %v662
    %689 = vmatpush.msra.mxu0 %v661
    %690 = vmatpush.msra.mxu0 %v660
    %691 = vmatpush.msra.mxu0 %v659
    %692 = vmatpush.msra.mxu0 %v658
    %693 = vmatpush.msra.mxu0 %v657
    %694 = vmatpush.msra.mxu0 %v656
    %695 = vmatpush.msra.mxu0 %v655
    %696 = vmatpush.msra.mxu0 %v654
    %697 = vmatpush.msra.mxu0 %v653
    %698 = vmatpush.msra.mxu0 %v652
    %699 = vmatpush.msra.mxu0 %v651
    %700 = vmatmul.f32.gmra.mxu0 %v668
    %v701 = vpop.f32.mrf.mxu0
    %v702 = vadd.f32 0.0, %v701
    %703 = vmatmul.f32.gmra.mxu0 %v669
    %v704 = vpop.f32.mrf.mxu0
    %v705 = vadd.f32 0.0, %v704
    %706 = vmatmul.f32.gmra.mxu0 %v670
    %v707 = vpop.f32.mrf.mxu0
    %v708 = vadd.f32 0.0, %v707
    %709 = vmatmul.f32.gmra.mxu0 %v671
    %v710 = vpop.f32.mrf.mxu0
    %v711 = vadd.f32 0.0, %v710
    %712 = vmatmul.f32.gmra.mxu0 %v672
    %v713 = vpop.f32.mrf.mxu0
    %v714 = vadd.f32 0.0, %v713
    %715 = vmatmul.f32.gmra.mxu0 %v673
    %v716 = vpop.f32.mrf.mxu0
    %v717 = vadd.f32 0.0, %v716
    %718 = vmatmul.f32.gmra.mxu0 %v674
    %v719 = vpop.f32.mrf.mxu0
    %v720 = vadd.f32 0.0, %v719
    %721 = vmatmul.f32.gmra.mxu0 %v675
    %v722 = vpop.f32.mrf.mxu0
    %v723 = vadd.f32 0.0, %v722
    %724 = vmatmul.f32.gmra.mxu0 %v676
    %v725 = vpop.f32.mrf.mxu0
    %v726 = vadd.f32 0.0, %v725
    %727 = vmatmul.f32.gmra.mxu0 %v677
    %v728 = vpop.f32.mrf.mxu0
    %v729 = vadd.f32 0.0, %v728
    %730 = vmatmul.f32.gmra.mxu0 %v678
    %v731 = vpop.f32.mrf.mxu0
    %v732 = vadd.f32 0.0, %v731
    %733 = vmatmul.f32.gmra.mxu0 %v679
    %v734 = vpop.f32.mrf.mxu0
    %v735 = vadd.f32 0.0, %v734
    %736 = vmatmul.f32.gmra.mxu0 %v680
    %v737 = vpop.f32.mrf.mxu0
    %v738 = vadd.f32 0.0, %v737
    %739 = vmatmul.f32.gmra.mxu0 %v681
    %v740 = vpop.f32.mrf.mxu0
    %v741 = vadd.f32 0.0, %v740
    %742 = vmatmul.f32.gmra.mxu0 %v682
    %v743 = vpop.f32.mrf.mxu0
    %v744 = vadd.f32 0.0, %v743
    %745 = vmatmul.f32.gmra.mxu0 %v683
    %v746 = vpop.f32.mrf.mxu0
    %v747 = vadd.f32 0.0, %v746
    %748 = vdwg.mxu0
    %v749 = vmax.f32 %v702, 0.0
    %v750 = vmax.f32 %v705, 0.0
    %v751 = vmax.f32 %v708, 0.0
    %v752 = vmax.f32 %v711, 0.0
    %v753 = vmax.f32 %v714, 0.0
    %v754 = vmax.f32 %v717, 0.0
    %v755 = vmax.f32 %v720, 0.0
    %v756 = vmax.f32 %v723, 0.0
    %v757 = vmax.f32 %v726, 0.0
    %v758 = vmax.f32 %v729, 0.0
    %v759 = vmax.f32 %v732, 0.0
    %v760 = vmax.f32 %v735, 0.0
    %v761 = vmax.f32 %v738, 0.0
    %v762 = vmax.f32 %v741, 0.0
    %v763 = vmax.f32 %v744, 0.0
    %v764 = vmax.f32 %v747, 0.0
    %765 = vxpose.xlu0.b32.start [1/16] %v749, 128
    %766 = vxpose.xlu0.b32.cont [2/16] %v750, 128
    %767 = vxpose.xlu0.b32.cont [3/16] %v751, 128
    %768 = vxpose.xlu0.b32.cont [4/16] %v752, 128
    %769 = vxpose.xlu0.b32.cont [5/16] %v753, 128
    %770 = vxpose.xlu0.b32.cont [6/16] %v754, 128
    %771 = vxpose.xlu0.b32.cont [7/16] %v755, 128
    %772 = vxpose.xlu0.b32.cont [8/16] %v756, 128
    %773 = vxpose.xlu0.b32.cont [9/16] %v757, 128
    %774 = vxpose.xlu0.b32.cont [10/16] %v758, 128
    %775 = vxpose.xlu0.b32.cont [11/16] %v759, 128
    %776 = vxpose.xlu0.b32.cont [12/16] %v760, 128
    %777 = vxpose.xlu0.b32.cont [13/16] %v761, 128
    %778 = vxpose.xlu0.b32.cont [14/16] %v762, 128
    %779 = vxpose.xlu0.b32.cont [15/16] %v763, 128
    %780 = vxpose.xlu0.b32.end [16/16] %v764, 128
    %v781 = vpop.trf.xlu0
    %v782 = vpop.trf.xlu0
    %v783 = vpop.trf.xlu0
    %v784 = vpop.trf.xlu0
    %v785 = vpop.trf.xlu0
    %v786 = vpop.trf.xlu0
    %v787 = vpop.trf.xlu0
    %v788 = vpop.trf.xlu0
    %v789 = vpop.trf.xlu0
    %v790 = vpop.trf.xlu0
    %v791 = vpop.trf.xlu0
    %v792 = vpop.trf.xlu0
    %v793 = vpop.trf.xlu0
    %v794 = vpop.trf.xlu0
    %v795 = vpop.trf.xlu0
    %v796 = vpop.trf.xlu0
    %v797 = vmax.f32 %v781, %v785
    %v798 = vmax.f32 %v782, %v786
    %v799 = vmax.f32 %v783, %v787
    %v800 = vmax.f32 %v784, %v788
    %v801 = vmax.f32 %v797, %v798
    %v802 = vmax.f32 %v799, %v800
    %v803 = vmax.f32 %v801, %v802
    %v804 = vrot.slane %v803, 4
    %v805 = vmax.f32 %v803, %v804
    %v806 = vrot.slane %v805, 2
    %v807 = vmax.f32 %v805, %v806
    %v808 = vrot.slane %v807, 1
    %v809 = vmax.f32 %v807, %v808
    %v810 = vmax.f32 %v789, %v793
    %v811 = vmax.f32 %v790, %v794
    %v812 = vmax.f32 %v791, %v795
    %v813 = vmax.f32 %v792, %v796
    %v814 = vmax.f32 %v810, %v811
    %v815 = vmax.f32 %v812, %v813
    %v816 = vmax.f32 %v814, %v815
    %v817 = vrot.slane %v816, 4
    %v818 = vmax.f32 %v816, %v817
    %v819 = vrot.slane %v818, 2
    %v820 = vmax.f32 %v818, %v819
    %v821 = vrot.slane %v820, 1
    %v822 = vmax.f32 %v820, %v821
    %vm823 = vcmask 1040384
    %v824 = vsel %vm823, %v809, %v822
    %vm825 = vcmask 1041408
    %v826 = vsel %vm825, %v824, 0.0
    %s827 = scalar_lea.vmem [#allocation7], 384
    %v828 = vld [vmem:[%s827] sm:$0xff]
    %v829 = vld [vmem:[%s827 + $0x8] sm:$0xff]
    %v830 = vld [vmem:[%s827 + $0x10] sm:$0xff]
    %v831 = vld [vmem:[%s827 + $0x18] sm:$0xff]
    %v832 = vld [vmem:[%s827 + $0x20] sm:$0xff]
    %v833 = vld [vmem:[%s827 + $0x28] sm:$0xff]
    %v834 = vld [vmem:[%s827 + $0x30] sm:$0xff]
    %v835 = vld [vmem:[%s827 + $0x38] sm:$0xff]
    %v836 = vld [vmem:[%s827 + $0x40] sm:$0xff]
    %v837 = vld [vmem:[%s827 + $0x48] sm:$0xff]
    %v838 = vld [vmem:[%s827 + $0x50] sm:$0xff]
    %v839 = vld [vmem:[%s827 + $0x58] sm:$0xff]
    %v840 = vld [vmem:[%s827 + $0x60] sm:$0xff]
    %v841 = vld [vmem:[%s827 + $0x68] sm:$0xff]
    %v842 = vld [vmem:[%s827 + $0x70] sm:$0xff]
    %v843 = vld [vmem:[%s827 + $0x78] sm:$0xff]
    %844 = vmatpush.msra.mxu0 %v843
    %845 = vmatpush.msra.mxu0 %v842
    %846 = vmatpush.msra.mxu0 %v841
    %847 = vmatpush.msra.mxu0 %v840
    %848 = vmatpush.msra.mxu0 %v839
    %849 = vmatpush.msra.mxu0 %v838
    %850 = vmatpush.msra.mxu0 %v837
    %851 = vmatpush.msra.mxu0 %v836
    %852 = vmatpush.msra.mxu0 %v835
    %853 = vmatpush.msra.mxu0 %v834
    %854 = vmatpush.msra.mxu0 %v833
    %855 = vmatpush.msra.mxu0 %v832
    %856 = vmatpush.msra.mxu0 %v831
    %857 = vmatpush.msra.mxu0 %v830
    %858 = vmatpush.msra.mxu0 %v829
    %859 = vmatpush.msra.mxu0 %v828
    %860 = vmatmul.f32.gmra.mxu0 %v826
    %v861 = vpop.f32.mrf.mxu0
    %v862 = vadd.f32 0.0, %v861
    %863 = vdwg.mxu0
    %864 = vst [vmem:[%s5] sm:$0xff] %v862
    // Predicated region
    $region22: #{unsupervised_meshnet_forward.2} parent=1 // pred_check
      _
    $region23: #{unsupervised_meshnet_forward.2} parent=1 // pred_check_branch
      %866 = sbr.rel (0) target = $region25
    $region24: #{unsupervised_meshnet_forward.2} parent=1 // pred_region
      _
    $region25: #{unsupervised_meshnet_forward.2} parent=1 // pred_fallthru
      _
    // Predicated region
    $region26: #{unsupervised_meshnet_forward.2} parent=1 // pred_check
      _
    $region27: #{unsupervised_meshnet_forward.2} parent=1 // pred_check_branch
      %868 = sbr.rel (0) target = $region29
    $region28: #{unsupervised_meshnet_forward.2} parent=1 // pred_region
      _
    $region29: #{unsupervised_meshnet_forward.2} parent=1 // pred_fallthru
      _
    %869 = vsyncpa [#allocation8], 1

</llo_original>
